<compile_context>
chip_gen: v6e
topology: v6e:2x2x1
jax: 0.10.0
libtpu: 0.0.40
codegen_flags: <defaults>
</compile_context>

<pallas_src>
import jax
import jax.numpy as jnp
from jax.experimental import pallas as pl
from jax.experimental.pallas import tpu as pltpu

N = 128  # batch size; lives on the lane axis inside the kernel


def network2_kernel(w_ref, xt_ref, o_ref):
    # w_ref : SMEM (3,)  f32  -> [tw00, tw01, bias]
    # xt_ref: VMEM (2, N) f32 -> row 0 = x[:, 0], row 1 = x[:, 1] (lane-dense)
    # o_ref : VMEM (1, N) f32 -> sigmoid(fc1(x)) with batch along lanes
    w0 = w_ref[0]   # hoist SMEM scalar reads once
    w1 = w_ref[1]
    b = w_ref[2]

    x0 = xt_ref[0:1, :]   # (1, N) lane-dense slice
    x1 = xt_ref[1:2, :]   # (1, N)

    # QuasiPolyLayer(2, 1): y = tw00 * x0 + tw01 * x1 + bias   (power == 1)
    z = w0 * x0 + w1 * x1 + b
    # Sigmoid (exp goes to the EUP slot; stays f32 on all generations).
    o_ref[...] = 1.0 / (1.0 + jnp.exp(-z))


def network2_forward(params, x):
    """params: (3,) f32 = [tw00, tw01, bias];  x: (N, 2) f32  ->  (N, 1) f32."""
    n = x.shape[0]
    xt = x.T  # (2, N): batch on the lane axis, features on sublanes
    out = pl.pallas_call(
        network2_kernel,
        out_shape=jax.ShapeDtypeStruct((1, n), jnp.float32),
        in_specs=[
            pl.BlockSpec(memory_space=pltpu.MemorySpace.SMEM),   # 3 scalar params
            pl.BlockSpec(memory_space=pltpu.MemorySpace.VMEM),   # x^T, full (2, N) tile
        ],
        out_specs=pl.BlockSpec(memory_space=pltpu.MemorySpace.VMEM),
    )(params, xt)
    return out.reshape(-1, 1)  # (N, 1), matching the torch output shape


def init_params(key):
    """Deterministically build Network2's parameters and return the 3 scalars
    that forward() actually uses: [synapses[0][0].tw[0], synapses[0][1].tw[0], bias[0]]."""
    k_tw00, k_tw01, k_bias, _k_bias_before = jax.random.split(key, 4)
    tw00 = jax.random.normal(k_tw00, (3,), jnp.float32)   # QuasiPolySynapse term_weights
    tw01 = jax.random.normal(k_tw01, (3,), jnp.float32)
    bias = jax.random.normal(k_bias, (1,), jnp.float32)   # QuasiPolyLayer bias (out_features=1)
    # power params stay at their init value 1.0; bias_before / tw[1:] never reach forward().
    return jnp.stack([tw00[0], tw01[0], bias[0]]).astype(jnp.float32)  # (3,)


def reference_forward(params, x):
    """Pure-JAX replica of Network2.forward for verification."""
    z = params[0] * x[:, 0] + params[1] * x[:, 1] + params[2]
    return (1.0 / (1.0 + jnp.exp(-z))).reshape(-1, 1)


if __name__ == "__main__":
    key = jax.random.PRNGKey(0)
    k_params, k_x = jax.random.split(key)

    params = init_params(k_params)                        # (3,) f32
    x = jax.random.normal(k_x, (N, 2), jnp.float32)       # (N, 2) f32

    out = jax.block_until_ready(network2_forward(params, x))
    ref = jax.block_until_ready(reference_forward(params, x))

    assert out.shape == (N, 1), out.shape
    assert jnp.allclose(out, ref, atol=1e-6, rtol=1e-6), (out, ref)
    print("KERNEL_OK")
</pallas_src>

<mosaic_0001>
module attributes {stable_mosaic.version = 11 : i64} {
  func.func @network2_kernel(%arg0: memref<3xf32, #tpu.memory_space<smem>>, %arg1: memref<2x128xf32, #tpu.memory_space<vmem>>, %arg2: memref<1x128xf32, #tpu.memory_space<vmem>>) attributes {dimension_semantics = [], scalar_prefetch = 0 : i64, scratch_operands = 0 : i64, tpu.core_type = #tpu.core_type<tc>} {
    %c0 = arith.constant 0 : index
    %0 = memref.load %arg0[%c0] : memref<3xf32, #tpu.memory_space<smem>>
    %c1 = arith.constant 1 : index
    %1 = memref.load %arg0[%c1] : memref<3xf32, #tpu.memory_space<smem>>
    %c2 = arith.constant 2 : index
    %2 = memref.load %arg0[%c2] : memref<3xf32, #tpu.memory_space<smem>>
    %c0_0 = arith.constant 0 : index
    %c0_1 = arith.constant 0 : index
    %3 = vector.load %arg1[%c0_0, %c0_1] : memref<2x128xf32, #tpu.memory_space<vmem>>, vector<1x128xf32>
    %c1_2 = arith.constant 1 : index
    %c0_3 = arith.constant 0 : index
    %4 = vector.load %arg1[%c1_2, %c0_3] : memref<2x128xf32, #tpu.memory_space<vmem>>, vector<1x128xf32>
    %5 = vector.broadcast %0 : f32 to vector<1x128xf32>
    %6 = arith.mulf %5, %3 : vector<1x128xf32>
    %7 = vector.broadcast %1 : f32 to vector<1x128xf32>
    %8 = arith.mulf %7, %4 : vector<1x128xf32>
    %9 = arith.addf %6, %8 : vector<1x128xf32>
    %10 = vector.broadcast %2 : f32 to vector<1x128xf32>
    %11 = arith.addf %9, %10 : vector<1x128xf32>
    %cst = arith.constant 0.000000e+00 : f32
    %12 = vector.broadcast %cst : f32 to vector<1x128xf32>
    %13 = arith.subf %12, %11 : vector<1x128xf32>
    %14 = math.exp %13 : vector<1x128xf32>
    %cst_4 = arith.constant 1.000000e+00 : f32
    %15 = vector.broadcast %cst_4 : f32 to vector<1x128xf32>
    %16 = arith.addf %15, %14 : vector<1x128xf32>
    %cst_5 = arith.constant 1.000000e+00 : f32
    %17 = vector.broadcast %cst_5 : f32 to vector<1x128xf32>
    %18 = arith.divf %17, %16 : vector<1x128xf32>
    %c0_6 = arith.constant 0 : index
    %c0_7 = arith.constant 0 : index
    %19 = vector.load %arg2[%c0_6, %c0_7] : memref<1x128xf32, #tpu.memory_space<vmem>>, vector<1x128xf32>
    tpu.vector_store %arg2[%c0_6, %c0_7], %18 {strides = array<i32>} : memref<1x128xf32, #tpu.memory_space<vmem>>, vector<1x128xf32>,
    return
  }
}

</mosaic_0001>

<llo_original>
// kernel: tpu_custom_call.1
$region0: #{tpu_custom_call.1}
  #allocation0 [shape = 'u32[]', space=smem, size = 0x4, offset = 0x4, fixed_abs, tag = 'smem constant byte address 0x4 - core index']
  #allocation1 [shape = 'u32[144,128]{1,0:T(1,128)}', space=vmem, size = 0x12000, scoped, tag = 'internal scratch']
  %s0 = inlined_call_operand.hbm [shape: f32[3], index: 0, kind: input, shape index: {}]
  %s1 = inlined_call_operand.hbm [shape: f32[2,128], index: 1, kind: input, shape index: {}]
  %s2 = inlined_call_operand.hbm [shape: f32[1,128], index: 2, kind: output, shape index: {}]
  %s3 = sld [smem:[#allocation0]]
  $region26: #{tpu_custom_call.1} parent=0
    _
  %s5 = ssub.s32 1, %s3
  %s6 = scalar_select 0, %s5, %s3
  $region1: #{tpu_custom_call.1} parent=0
    #allocation2 [shape = 'u8[512]{0}', space=smem, size = 0x200, scoped, tag = 'input window, operand 0, single buffered']
    #allocation3 [shape = 's32[1]{0}', space=sflag, size = 0x4, scoped, tag = 'scoped memory for tpu_custom_call.1']
    #allocation4 [shape = 's32[1]{0}', space=sflag, size = 0x4, scoped, tag = 'scoped memory for tpu_custom_call.1']
    #allocation5 [shape = 's32[1]{0}', space=sflag, size = 0x4, scoped, tag = 'scoped memory for tpu_custom_call.1']
    #allocation6 [shape = 'u8[1024]{0}', space=vmem, size = 0x400, scoped, tag = 'input window, operand 1, single buffered']
    #allocation7 [shape = 'u8[512]{0}', space=vmem, size = 0x400, scoped, tag = 'output window, operand 0, single buffered']
    %7 = vsyncpa [#allocation5], 0
    %8 = vsyncpa [#allocation3], 0
    %9 = vsyncpa [#allocation4], 0
    // Predicated region
    $region2: #{tpu_custom_call.1} parent=1 // pred_check
      _
    $region3: #{tpu_custom_call.1} parent=1 // pred_check_branch
      %11 = sbr.rel (0) target = $region5
    $region4: #{tpu_custom_call.1} parent=1 // pred_region
      %s13 = ssub.s32 16, 16
      %14 = vsyncadd [#allocation5], %s13
      %17 = dma.hbm_to_smem %s0, 16, [#allocation2], [#allocation5]
    $region5: #{tpu_custom_call.1} parent=1 // pred_fallthru
      _
    // Predicated region
    $region6: #{tpu_custom_call.1} parent=1 // pred_check
      _
    $region7: #{tpu_custom_call.1} parent=1 // pred_check_branch
      %19 = sbr.rel (0) target = $region9
    $region8: #{tpu_custom_call.1} parent=1 // pred_region
      %s21 = ssub.s32 32, 32
      %22 = vsyncadd [#allocation3], %s21
      %s24 = sshll.u32 [#allocation6], 4
      %s25 = int_to_ptr.vmem [resolvable:$true] %s24
      %27 = dma.hbm_to_vmem [thread:$0]  %s1, 32, %s25, [#allocation3]
    $region9: #{tpu_custom_call.1} parent=1 // pred_fallthru
      _
    // Predicated region
    $region10: #{tpu_custom_call.1} parent=1 // pred_check
      _
    $region11: #{tpu_custom_call.1} parent=1 // pred_check_branch
      %29 = sbr.rel (0) target = $region13
    $region12: #{tpu_custom_call.1} parent=1 // pred_region
      %30 = dma.done [#allocation5], 16
    $region13: #{tpu_custom_call.1} parent=1 // pred_fallthru
      _
    // Predicated region
    $region14: #{tpu_custom_call.1} parent=1 // pred_check
      _
    $region15: #{tpu_custom_call.1} parent=1 // pred_check_branch
      %32 = sbr.rel (0) target = $region17
    $region16: #{tpu_custom_call.1} parent=1 // pred_region
      %33 = dma.done [#allocation3], 32
    $region17: #{tpu_custom_call.1} parent=1 // pred_fallthru
      _
    %34 = sfence
    %s35 = sld [smem:[#allocation2]]
    %s36 = sld [smem:[#allocation2 + $0x1]]
    %s37 = sld [smem:[#allocation2 + $0x2]]
    %v38 = vld [vmem:[#allocation6] sm:$0x1]
    %v39 = vld [vmem:[#allocation6 + $0x1] sm:$0x1]
    %v40 = vstv %s35
    %v41 = vmul.f32 %v40, %v38
    %v42 = vstv %s36
    %v43 = vmul.f32 %v42, %v39
    %v44 = vadd.f32 %v41, %v43
    %v45 = vstv %s37
    %v46 = vadd.f32 %v44, %v45
    %v47 = vsub.f32 0.0, %v46
    %v48 = vmul.f32 %v47, 1.442695
    %v49 = vpow.pop %v48
    %v50 = vadd.f32 %v49, 1.0
    %v51 = vrcp.pop %v50
    %v52 = vmul.f32 1.0, %v51
    %53 = vst [vmem:[#allocation7] sm:$0x1] %v52
    // Predicated region
    $region18: #{tpu_custom_call.1} parent=1 // pred_check
      _
    $region19: #{tpu_custom_call.1} parent=1 // pred_check_branch
      %55 = sbr.rel (0) target = $region21
    $region20: #{tpu_custom_call.1} parent=1 // pred_region
      %s57 = ssub.s32 16, 16
      %58 = vsyncadd [#allocation4], %s57
      %s60 = sshll.u32 [#allocation7], 4
      %s61 = int_to_ptr.vmem [resolvable:$true] %s60
      %63 = dma.vmem_to_hbm [thread:$0]  %s61, 16, %s2, [#allocation4]
    $region21: #{tpu_custom_call.1} parent=1 // pred_fallthru
      _
    // Predicated region
    $region22: #{tpu_custom_call.1} parent=1 // pred_check
      _
    $region23: #{tpu_custom_call.1} parent=1 // pred_check_branch
      %65 = sbr.rel (0) target = $region25
    $region24: #{tpu_custom_call.1} parent=1 // pred_region
      %66 = dma.done [#allocation4], 16
    $region25: #{tpu_custom_call.1} parent=1 // pred_fallthru
      _
    %67 = vsyncpa [#allocation3], 1
    %68 = vsyncpa [#allocation4], 1
    %69 = vsyncpa [#allocation5], 1

</llo_original>
